<compile_context>
chip_gen: v5e
topology: v5e:2x2
jax: 0.10.0
libtpu: 0.0.40
codegen_flags: <defaults>
</compile_context>

<pallas_src>
import functools

import jax
import jax.numpy as jnp
from jax.experimental import pallas as pl
from jax.experimental.pallas import tpu as pltpu

_MIB = 1024 * 1024


def _round_up(x, m):
    return (x + m - 1) // m * m


@functools.lru_cache(maxsize=None)
def _vmem_capacity_bytes():
    """Per-core VMEM capacity; conservative v7x fallback if the query fails."""
    try:
        cap = int(getattr(pltpu.get_tpu_info(), "vmem_capacity_bytes", 0))
        if cap > 0:
            return cap
    except Exception:
        pass
    return 64 * _MIB


# --------------------------------------------------------------------------- #
# Kernels
# --------------------------------------------------------------------------- #
def _ffn_resident_kernel(x_ref, w1_ref, b1_ref, w2_ref, b2_ref, o_ref):
    """Weights fully resident in VMEM; one grid step per row tile.

    x_ref : (tm, H) caller dtype     w1_ref: (H, F) bf16   b1_ref: (1, F) f32
    w2_ref: (F, H) bf16              b2_ref: (1, H) f32    o_ref : (tm, H)
    """
    x = x_ref[...].astype(jnp.bfloat16)                       # cast in-kernel
    h = jnp.dot(x, w1_ref[...], preferred_element_type=jnp.float32)
    h = jnp.maximum(h + b1_ref[...], 0.0)                     # bias + ReLU (f32 VPU)
    out = jnp.dot(h.astype(jnp.bfloat16), w2_ref[...],
                  preferred_element_type=jnp.float32)
    o_ref[...] = (out + b2_ref[...]).astype(o_ref.dtype)


def _ffn_streamed_kernel(x_ref, w1_ref, b1_ref, w2_ref, b2_ref, o_ref, acc_ref):
    """Weights streamed in F chunks; grid = (row tiles, F tiles)."""
    f = pl.program_id(1)

    @pl.when(f == 0)
    def _init():
        acc_ref[...] = jnp.zeros_like(acc_ref)

    x = x_ref[...].astype(jnp.bfloat16)
    h = jnp.dot(x, w1_ref[...], preferred_element_type=jnp.float32)
    h = jnp.maximum(h + b1_ref[...], 0.0)
    acc_ref[...] += jnp.dot(h.astype(jnp.bfloat16), w2_ref[...],
                            preferred_element_type=jnp.float32)

    @pl.when(f == pl.num_programs(1) - 1)
    def _finalize():
        o_ref[...] = (acc_ref[...] + b2_ref[...]).astype(o_ref.dtype)


# --------------------------------------------------------------------------- #
# Tiling / VMEM budgeting
# --------------------------------------------------------------------------- #
def _pick_f_tile(H, F, vmem_cap):
    """Full-F (weights resident, single-buffered) when they fit ~30% of VMEM,
    else stream F in chunks that are multiples of 256 (v6e/v7x MXU width)."""
    if 2 * H * F * 2 <= int(vmem_cap * 0.30):      # W1 + W2 in bf16, counted once
        return F
    for cand in (1024, 512, 256, 128):             # 128 only as a last resort
        if cand < F and F % cand == 0:
            return cand
    return F                                       # no aligned divisor: resident


def _vmem_estimate(tm, H, tf, n_f, x_bytes, out_bytes):
    bf16, f32 = 2, 4
    resident = n_f == 1
    w_bufs = 1 if resident else 2                  # resident weights: whole-array VMEM
    H_p = _round_up(H, 128)
    tf_p = _round_up(tf, 128)
    est = 2 * tm * H_p * x_bytes                   # x blocks (double-buffered)
    est += w_bufs * 2 * H_p * tf_p * bf16          # W1 + W2
    est += w_bufs * 8 * (tf_p + H_p) * f32         # b1 + b2 (sublane padded)
    est += 2 * tm * H_p * out_bytes                # output blocks (double-buffered)
    est += tm * tf_p * (f32 + bf16)                # h intermediate (f32) + bf16 copy
    if not resident:
        est += tm * H_p * f32                      # f32 accumulator scratch
    return est


# --------------------------------------------------------------------------- #
# Wrapper
# --------------------------------------------------------------------------- #
@functools.partial(jax.jit, static_argnames=("tm", "tf"))
def ffn_pallas(x, w1, b1, w2, b2, *, tm=None, tf=None):
    """Eval-mode FFN: Linear(H->F) -> ReLU -> [Dropout=id] -> Linear(F->H).

    x: (B, S, H); w1: (H, F); b1: (F,); w2: (F, H); b2: (H,). Returns (B, S, H).
    """
    B, S, H = x.shape
    F = w1.shape[1]
    M = B * S

    vmem_cap = _vmem_capacity_bytes()
    cap = int(vmem_cap * 0.8)                      # leave compiler headroom
    headroom = 8 * _MIB

    tf_eff = tf if tf is not None else _pick_f_tile(H, F, vmem_cap)
    assert F % tf_eff == 0, "F tile must divide FF_SIZE"
    n_f = F // tf_eff
    resident = n_f == 1

    x_bytes = jnp.dtype(x.dtype).itemsize
    out_bytes = x_bytes

    # Row tile: large (amortize ~0.35us/step, tall MXU panels), shrunk to fit VMEM.
    tm_target = tm if tm is not None else (512 if resident else 1024)
    tm_eff = max(8, min(tm_target, _round_up(M, 16)))
    tm_eff = _round_up(tm_eff, 8)
    while tm_eff > 256 and (
            _vmem_estimate(tm_eff, H, tf_eff, n_f, x_bytes, out_bytes) + headroom > cap):
        tm_eff = max(256, _round_up(tm_eff // 2, 8))

    # Guarantee >= 2 row tiles so the "parallel" axis can shard across both
    # TensorCores on v7x (no-op cost on single-TC v5e/v6e).
    m_pad = _round_up(M, tm_eff)
    while m_pad // tm_eff < 2 and tm_eff > 8:
        tm_eff = max(8, _round_up(tm_eff // 2, 8))
        m_pad = _round_up(M, tm_eff)

    vmem_limit = max(
        min(32 * _MIB, cap),
        min(_vmem_estimate(tm_eff, H, tf_eff, n_f, x_bytes, out_bytes) + headroom, cap),
    )

    # Wrapper prep: x keeps its dtype (cast to bf16 happens inside the kernel),
    # pad rows only when needed.  Weight casts are per-call; XLA fuses them.
    x2d = x.reshape(M, H)
    if m_pad != M:
        x2d = jnp.pad(x2d, ((0, m_pad - M), (0, 0)))
    w1_bf = w1.astype(jnp.bfloat16)
    w2_bf = w2.astype(jnp.bfloat16)
    b1_2d = b1.reshape(1, F).astype(jnp.float32)
    b2_2d = b2.reshape(1, H).astype(jnp.float32)

    if resident:
        # Weights/biases as whole-array VMEM operands: DMA'd once, single buffer.
        vmem_full = pl.BlockSpec(memory_space=pltpu.MemorySpace.VMEM)
        out2d = pl.pallas_call(
            _ffn_resident_kernel,
            out_shape=jax.ShapeDtypeStruct((m_pad, H), x.dtype),
            grid=(m_pad // tm_eff,),
            in_specs=[
                pl.BlockSpec((tm_eff, H), lambda i: (i, 0)),   # x rows
                vmem_full,                                     # W1
                vmem_full,                                     # b1
                vmem_full,                                     # W2
                vmem_full,                                     # b2
            ],
            out_specs=pl.BlockSpec((tm_eff, H), lambda i: (i, 0)),
            compiler_params=pltpu.CompilerParams(
                dimension_semantics=("parallel",),
                vmem_limit_bytes=vmem_limit,
            ),
        )(x2d, w1_bf, b1_2d, w2_bf, b2_2d)
    else:
        out2d = pl.pallas_call(
            _ffn_streamed_kernel,
            out_shape=jax.ShapeDtypeStruct((m_pad, H), x.dtype),
            grid=(m_pad // tm_eff, n_f),
            in_specs=[
                pl.BlockSpec((tm_eff, H), lambda i, f: (i, 0)),   # x rows
                pl.BlockSpec((H, tf_eff), lambda i, f: (0, f)),   # W1 chunk
                pl.BlockSpec((1, tf_eff), lambda i, f: (0, f)),   # b1 chunk
                pl.BlockSpec((tf_eff, H), lambda i, f: (f, 0)),   # W2 chunk
                pl.BlockSpec((1, H), lambda i, f: (0, 0)),        # b2
            ],
            out_specs=pl.BlockSpec((tm_eff, H), lambda i, f: (i, 0)),
            scratch_shapes=[pltpu.VMEM((tm_eff, H), jnp.float32)],
            compiler_params=pltpu.CompilerParams(
                dimension_semantics=("parallel", "arbitrary"),
                vmem_limit_bytes=vmem_limit,
            ),
        )(x2d, w1_bf, b1_2d, w2_bf, b2_2d)

    return out2d[:M].reshape(B, S, H)


def _ffn_reference(x, w1, b1, w2, b2):
    h = jnp.maximum(x @ w1 + b1, 0.0)
    return h @ w2 + b2


if __name__ == "__main__":
    key = jax.random.PRNGKey(0)
    kx, k1, k2, k3, k4, kx2 = jax.random.split(key, 6)

    # --- config 1: module-scale shapes (HIDDEN_SIZE=32, FF_SIZE=64), resident path
    B, S, H, F = 2, 8, 32, 64
    x = jax.random.normal(kx, (B, S, H), dtype=jnp.float32)
    w1 = jax.random.uniform(k1, (H, F), minval=-0.1, maxval=0.1, dtype=jnp.float32)
    b1 = jax.random.uniform(k2, (F,), minval=-0.1, maxval=0.1, dtype=jnp.float32)
    w2 = jax.random.uniform(k3, (F, H), minval=-0.1, maxval=0.1, dtype=jnp.float32)
    b2 = jax.random.uniform(k4, (H,), minval=-0.1, maxval=0.1, dtype=jnp.float32)

    out = jax.block_until_ready(ffn_pallas(x, w1, b1, w2, b2))
    ref = _ffn_reference(x, w1, b1, w2, b2)
    assert out.shape == (B, S, H)
    # bf16 MXU inputs with f32 accumulation -> looser tolerance than pure f32.
    assert jnp.allclose(out, ref, atol=2e-2, rtol=2e-2), \
        float(jnp.max(jnp.abs(out - ref)))

    # --- config 2: force the streamed-F accumulation path + multi-row-tile grid
    B2, S2, H2, F2 = 4, 64, 128, 256
    x2 = jax.random.normal(kx2, (B2, S2, H2), dtype=jnp.float32)
    k5, k6, k7, k8 = jax.random.split(k1, 4)
    w1b = jax.random.uniform(k5, (H2, F2), minval=-0.05, maxval=0.05, dtype=jnp.float32)
    b1b = jax.random.uniform(k6, (F2,), minval=-0.05, maxval=0.05, dtype=jnp.float32)
    w2b = jax.random.uniform(k7, (F2, H2), minval=-0.05, maxval=0.05, dtype=jnp.float32)
    b2b = jax.random.uniform(k8, (H2,), minval=-0.05, maxval=0.05, dtype=jnp.float32)

    out2 = jax.block_until_ready(ffn_pallas(x2, w1b, b1b, w2b, b2b, tf=128))
    ref2 = _ffn_reference(x2, w1b, b1b, w2b, b2b)
    assert jnp.allclose(out2, ref2, atol=2e-2, rtol=2e-2), \
        float(jnp.max(jnp.abs(out2 - ref2)))

    # TODO(synk): training-mode dropout (stochastic masking via pltpu.prng_*) is not
    # implemented; this kernel provides eval/inference semantics only.
    print("KERNEL_OK")
</pallas_src>

<mosaic_0001>
module attributes {stable_mosaic.version = 11 : i64} {
  func.func @_ffn_resident_kernel(%arg0: i32, %arg1: memref<8x32xf32, #tpu.memory_space<vmem>>, %arg2: memref<32x64xbf16, #tpu.memory_space<vmem>>, %arg3: memref<1x64xf32, #tpu.memory_space<vmem>>, %arg4: memref<64x32xbf16, #tpu.memory_space<vmem>>, %arg5: memref<1x32xf32, #tpu.memory_space<vmem>>, %arg6: memref<8x32xf32, #tpu.memory_space<vmem>>) attributes {dimension_semantics = [#tpu.dimension_semantics<parallel>], iteration_bounds = array<i64: 2>, scalar_prefetch = 0 : i64, scratch_operands = 0 : i64, tpu.core_type = #tpu.core_type<tc>, window_params = [{transform_indices = @transform_0, window_bounds = array<i64: 8, 32>}, {pipeline_mode = #tpu.pipeline_mode<synchronous>, transform_indices = @transform_1, window_bounds = array<i64: 32, 64>}, {pipeline_mode = #tpu.pipeline_mode<synchronous>, transform_indices = @transform_2, window_bounds = array<i64: 1, 64>}, {pipeline_mode = #tpu.pipeline_mode<synchronous>, transform_indices = @transform_3, window_bounds = array<i64: 64, 32>}, {pipeline_mode = #tpu.pipeline_mode<synchronous>, transform_indices = @transform_4, window_bounds = array<i64: 1, 32>}, {transform_indices = @transform_5, window_bounds = array<i64: 8, 32>}]} {
    %c0 = arith.constant 0 : index
    %c0_0 = arith.constant 0 : index
    %0 = vector.load %arg1[%c0, %c0_0] : memref<8x32xf32, #tpu.memory_space<vmem>>, vector<8x32xf32>
    %1 = arith.truncf %0 : vector<8x32xf32> to vector<8x32xbf16>
    %c0_1 = arith.constant 0 : index
    %c0_2 = arith.constant 0 : index
    %2 = vector.load %arg2[%c0_1, %c0_2] : memref<32x64xbf16, #tpu.memory_space<vmem>>, vector<32x64xbf16>
    %cst = arith.constant dense<0.000000e+00> : vector<8x64xf32>
    %3 = tpu.matmul %1, %2, %cst {dimension_numbers = #tpu.dot_dimension_numbers<[1], [0], [0], [1], [0, 0, 1, 1], [], []>} : vector<8x32xbf16>, vector<32x64xbf16>, vector<8x64xf32> -> vector<8x64xf32>
    %c0_3 = arith.constant 0 : index
    %c0_4 = arith.constant 0 : index
    %4 = vector.load %arg3[%c0_3, %c0_4] : memref<1x64xf32, #tpu.memory_space<vmem>>, vector<1x64xf32>
    %5 = vector.broadcast %4 : vector<1x64xf32> to vector<8x64xf32>
    %6 = arith.addf %3, %5 : vector<8x64xf32>
    %cst_5 = arith.constant 0.000000e+00 : f32
    %7 = vector.broadcast %cst_5 : f32 to vector<8x64xf32>
    %8 = arith.maximumf %6, %7 : vector<8x64xf32>
    %9 = arith.truncf %8 : vector<8x64xf32> to vector<8x64xbf16>
    %c0_6 = arith.constant 0 : index
    %c0_7 = arith.constant 0 : index
    %10 = vector.load %arg4[%c0_6, %c0_7] : memref<64x32xbf16, #tpu.memory_space<vmem>>, vector<64x32xbf16>
    %cst_8 = arith.constant dense<0.000000e+00> : vector<8x32xf32>
    %11 = tpu.matmul %9, %10, %cst_8 {dimension_numbers = #tpu.dot_dimension_numbers<[1], [0], [0], [1], [0, 0, 1, 1], [], []>} : vector<8x64xbf16>, vector<64x32xbf16>, vector<8x32xf32> -> vector<8x32xf32>
    %c0_9 = arith.constant 0 : index
    %c0_10 = arith.constant 0 : index
    %12 = vector.load %arg5[%c0_9, %c0_10] : memref<1x32xf32, #tpu.memory_space<vmem>>, vector<1x32xf32>
    %13 = vector.broadcast %12 : vector<1x32xf32> to vector<8x32xf32>
    %14 = arith.addf %11, %13 : vector<8x32xf32>
    %c0_11 = arith.constant 0 : index
    %c0_12 = arith.constant 0 : index
    %15 = vector.load %arg6[%c0_11, %c0_12] : memref<8x32xf32, #tpu.memory_space<vmem>>, vector<8x32xf32>
    tpu.vector_store %arg6[%c0_11, %c0_12], %14 {strides = array<i32>} : memref<8x32xf32, #tpu.memory_space<vmem>>, vector<8x32xf32>,
    return
  }
  func.func @transform_0(%arg0: i32) -> (i32, i32) {
    %c0_i32 = arith.constant 0 : i32
    %c0_i32_0 = arith.constant 0 : i32
    return %arg0, %c0_i32 : i32, i32
  }
  func.func @transform_1(%arg0: i32) -> (i32, i32) {
    %c0_i32 = arith.constant 0 : i32
    %c0_i32_0 = arith.constant 0 : i32
    %c0_i32_1 = arith.constant 0 : i32
    return %c0_i32, %c0_i32_0 : i32, i32
  }
  func.func @transform_2(%arg0: i32) -> (i32, i32) {
    %c0_i32 = arith.constant 0 : i32
    %c0_i32_0 = arith.constant 0 : i32
    %c0_i32_1 = arith.constant 0 : i32
    return %c0_i32, %c0_i32_0 : i32, i32
  }
  func.func @transform_3(%arg0: i32) -> (i32, i32) {
    %c0_i32 = arith.constant 0 : i32
    %c0_i32_0 = arith.constant 0 : i32
    %c0_i32_1 = arith.constant 0 : i32
    return %c0_i32, %c0_i32_0 : i32, i32
  }
  func.func @transform_4(%arg0: i32) -> (i32, i32) {
    %c0_i32 = arith.constant 0 : i32
    %c0_i32_0 = arith.constant 0 : i32
    %c0_i32_1 = arith.constant 0 : i32
    return %c0_i32, %c0_i32_0 : i32, i32
  }
  func.func @transform_5(%arg0: i32) -> (i32, i32) {
    %c0_i32 = arith.constant 0 : i32
    %c0_i32_0 = arith.constant 0 : i32
    return %arg0, %c0_i32 : i32, i32
  }
}

</mosaic_0001>

<llo_original>
// kernel: ffn_pallas.1
$region0: #{ffn_pallas.1}
  #allocation0 [shape = 'u32[]', space=smem, size = 0x4, offset = 0x4, fixed_abs, tag = 'smem constant byte address 0x4 - core index']
  #allocation1 [shape = 'u32[72,128]{1,0:T(1,128)}', space=vmem, size = 0x9000, scoped, tag = 'internal scratch']
  %s0 = inlined_call_operand.vmem [shape: f32[16,32], index: 0, kind: input, shape index: {}]
  %s1 = inlined_call_operand.vmem [shape: bf16[32,64], index: 1, kind: input, shape index: {}]
  %s2 = inlined_call_operand.vmem [shape: f32[1,64], index: 2, kind: input, shape index: {}]
  %s3 = inlined_call_operand.vmem [shape: bf16[64,32], index: 3, kind: input, shape index: {}]
  %s4 = inlined_call_operand.vmem [shape: f32[1,32], index: 4, kind: input, shape index: {}]
  %s5 = inlined_call_operand.hbm [shape: f32[16,32], index: 5, kind: output, shape index: {}]
  %s6 = sld [smem:[#allocation0]]
  $region53: #{ffn_pallas.1} parent=0
    _
  %s8 = ssub.s32 1, %s6
  %s9 = scalar_select 0, %s8, %s6
  $region1: #{ffn_pallas.1} parent=0
    #allocation2 [shape = 'u8[8192]{0}', space=vmem, size = 0x2000, scoped, tag = 'output window, operand 0']
    #allocation3 [shape = 's32[2]{0}', space=sflag, size = 0x8, scoped, tag = 'scoped memory for ffn_pallas.1']
    %10 = vsyncpa [#allocation3], 0
    %s11 = scalar_lea.sflag [#allocation3], 1
    %12 = vsyncpa %s11, 0
    loop: start=0, step=1, limit=4
    $region2: #{ffn_pallas.1} parent=1 // loop_pre_header
      _
    $region3: #{ffn_pallas.1} parent=1 // loop_header
      %s14 = sphi 0, %s18
      %p15 = scmp.ge.s32.totalorder %s14, 4
      %s24 = sphi 0, %s26
      %s27 = sphi 0, %s24
      %s28 = sphi 0, %s27
      %s44 = sphi 0, %s28
      %s48 = sphi 0, %s48
      %s50 = sphi 0, %s48
      %s51 = sphi 0, %s50
      %s65 = sphi 0, %s51
      %s69 = sphi 0, %s69
      %s71 = sphi 0, %s69
      %s72 = sphi 0, %s71
      %s86 = sphi 0, %s72
      %s90 = sphi 0, %s90
      %s92 = sphi 0, %s90
      %s93 = sphi 0, %s92
      %s107 = sphi 0, %s93
      %s111 = sphi 0, %s111
      %s113 = sphi 0, %s111
      %s114 = sphi 0, %s113
      %s128 = sphi 0, %s114
      %s134 = sphi 0, %s136
      %s137 = sphi 0, %s134
      %s138 = sphi 0, %s137
      %s154 = sphi 0, %s138
    $region4: #{ffn_pallas.1} parent=1 // loop_header_branch
      %17 = sbr.rel (%p15) target = $region8
    $region5: #{ffn_pallas.1} parent=1 // loop_body
      %s19 = ssub.s32 %s14, 1
      %s20 = ssub.s32 %s14, 2
      %s21 = sadd.s32 %s14, 1
      %s22 = ssub.s32 %s14, %s21
      %p23 = scmp.eq.s32.totalorder %s22, 0
      %s25 = sadd.s32 %s24, 1
      %s26 = scalar_select %p23, %s24, %s25
      %p29 = pneg %p23
      %p30 = scmp.eq.s32.totalorder %s14, 1
      %p31 = por %p29, %p30
      %p32 = scmp.ne.s32.totalorder %s24, %s27
      %p33 = scmp.eq.s32.totalorder %s14, 0
      %p34 = por %p32, %p33
      %p35 = scmp.ne.s32.totalorder %s24, %s27
      %p36 = scmp.eq.s32.totalorder %s19, 1
      %p37 = por %p35, %p36
      %p38 = scmp.ne.s32.totalorder %s27, %s28
      %p39 = scmp.eq.s32.totalorder %s19, 0
      %p40 = por %p38, %p39
      %p41 = scmp.ne.s32.totalorder %s27, %s28
      %p42 = scmp.eq.s32.totalorder %s20, 1
      %p43 = por %p41, %p42
      %p45 = scmp.ne.s32.totalorder %s28, %s44
      %p46 = scmp.eq.s32.totalorder %s20, 0
      %p47 = por %p45, %p46
      %s49 = sadd.s32 %s48, 1
      %p52 = scmp.eq.s32.totalorder %s14, 1
      %p53 = scmp.ne.s32.totalorder %s48, %s50
      %p54 = scmp.eq.s32.totalorder %s14, 0
      %p55 = por %p53, %p54
      %p56 = scmp.ne.s32.totalorder %s48, %s50
      %p57 = scmp.eq.s32.totalorder %s19, 1
      %p58 = por %p56, %p57
      %p59 = scmp.ne.s32.totalorder %s50, %s51
      %p60 = scmp.eq.s32.totalorder %s19, 0
      %p61 = por %p59, %p60
      %p62 = scmp.ne.s32.totalorder %s50, %s51
      %p63 = scmp.eq.s32.totalorder %s20, 1
      %p64 = por %p62, %p63
      %p66 = scmp.ne.s32.totalorder %s51, %s65
      %p67 = scmp.eq.s32.totalorder %s20, 0
      %p68 = por %p66, %p67
      %s70 = sadd.s32 %s69, 1
      %p73 = scmp.eq.s32.totalorder %s14, 1
      %p74 = scmp.ne.s32.totalorder %s69, %s71
      %p75 = scmp.eq.s32.totalorder %s14, 0
      %p76 = por %p74, %p75
      %p77 = scmp.ne.s32.totalorder %s69, %s71
      %p78 = scmp.eq.s32.totalorder %s19, 1
      %p79 = por %p77, %p78
      %p80 = scmp.ne.s32.totalorder %s71, %s72
      %p81 = scmp.eq.s32.totalorder %s19, 0
      %p82 = por %p80, %p81
      %p83 = scmp.ne.s32.totalorder %s71, %s72
      %p84 = scmp.eq.s32.totalorder %s20, 1
      %p85 = por %p83, %p84
      %p87 = scmp.ne.s32.totalorder %s72, %s86
      %p88 = scmp.eq.s32.totalorder %s20, 0
      %p89 = por %p87, %p88
      %s91 = sadd.s32 %s90, 1
      %p94 = scmp.eq.s32.totalorder %s14, 1
      %p95 = scmp.ne.s32.totalorder %s90, %s92
      %p96 = scmp.eq.s32.totalorder %s14, 0
      %p97 = por %p95, %p96
      %p98 = scmp.ne.s32.totalorder %s90, %s92
      %p99 = scmp.eq.s32.totalorder %s19, 1
      %p100 = por %p98, %p99
      %p101 = scmp.ne.s32.totalorder %s92, %s93
      %p102 = scmp.eq.s32.totalorder %s19, 0
      %p103 = por %p101, %p102
      %p104 = scmp.ne.s32.totalorder %s92, %s93
      %p105 = scmp.eq.s32.totalorder %s20, 1
      %p106 = por %p104, %p105
      %p108 = scmp.ne.s32.totalorder %s93, %s107
      %p109 = scmp.eq.s32.totalorder %s20, 0
      %p110 = por %p108, %p109
      %s112 = sadd.s32 %s111, 1
      %p115 = scmp.eq.s32.totalorder %s14, 1
      %p116 = scmp.ne.s32.totalorder %s111, %s113
      %p117 = scmp.eq.s32.totalorder %s14, 0
      %p118 = por %p116, %p117
      %p119 = scmp.ne.s32.totalorder %s111, %s113
      %p120 = scmp.eq.s32.totalorder %s19, 1
      %p121 = por %p119, %p120
      %p122 = scmp.ne.s32.totalorder %s113, %s114
      %p123 = scmp.eq.s32.totalorder %s19, 0
      %p124 = por %p122, %p123
      %p125 = scmp.ne.s32.totalorder %s113, %s114
      %p126 = scmp.eq.s32.totalorder %s20, 1
      %p127 = por %p125, %p126
      %p129 = scmp.ne.s32.totalorder %s114, %s128
      %p130 = scmp.eq.s32.totalorder %s20, 0
      %p131 = por %p129, %p130
      %s132 = ssub.s32 %s14, %s21
      %p133 = scmp.eq.s32.totalorder %s132, 0
      %s135 = sadd.s32 %s134, 1
      %s136 = scalar_select %p133, %s134, %s135
      %p139 = pneg %p133
      %p140 = scmp.eq.s32.totalorder %s14, 1
      %p141 = por %p139, %p140
      %p142 = scmp.ne.s32.totalorder %s134, %s137
      %p143 = scmp.eq.s32.totalorder %s14, 0
      %p144 = por %p142, %p143
      %p145 = scmp.ne.s32.totalorder %s134, %s137
      %p146 = scmp.eq.s32.totalorder %s19, 1
      %p147 = por %p145, %p146
      %p148 = scmp.ne.s32.totalorder %s137, %s138
      %p149 = scmp.eq.s32.totalorder %s19, 0
      %p150 = por %p148, %p149
      %p151 = scmp.ne.s32.totalorder %s137, %s138
      %p152 = scmp.eq.s32.totalorder %s20, 1
      %p153 = por %p151, %p152
      %p155 = scmp.ne.s32.totalorder %s138, %s154
      %p156 = scmp.eq.s32.totalorder %s20, 0
      %p157 = por %p155, %p156
      %p158 = scmp.le.s32.totalorder 1, %s14
      %p159 = scmp.lt.s32.totalorder %s14, 3
      %p160 = pnand %p158, %p159
      %p161 = pneg %p160
      // Predicated region
      $region9: #{ffn_pallas.1} parent=5 // pred_check
        _
      $region10: #{ffn_pallas.1} parent=5 // pred_check_branch
        %163 = sbr.rel (%p160) target = $region12
      $region11: #{ffn_pallas.1} parent=5 // pred_region
        %s164 = ssub.s32 %s14, 1
        // Predicated region
        $region13: #{ffn_pallas.1} parent=11 // pred_check
          %p165 = pneg %p61
        $region14: #{ffn_pallas.1} parent=11 // pred_check_branch
          %167 = sbr.rel (%p165) target = $region16
        $region15: #{ffn_pallas.1} parent=11 // pred_region
          _
        $region16: #{ffn_pallas.1} parent=11 // pred_fallthru
          _
        // Predicated region
        $region17: #{ffn_pallas.1} parent=11 // pred_check
          %p168 = pneg %p82
        $region18: #{ffn_pallas.1} parent=11 // pred_check_branch
          %170 = sbr.rel (%p168) target = $region20
        $region19: #{ffn_pallas.1} parent=11 // pred_region
          _
        $region20: #{ffn_pallas.1} parent=11 // pred_fallthru
          _
        // Predicated region
        $region21: #{ffn_pallas.1} parent=11 // pred_check
          %p171 = pneg %p103
        $region22: #{ffn_pallas.1} parent=11 // pred_check_branch
          %173 = sbr.rel (%p171) target = $region24
        $region23: #{ffn_pallas.1} parent=11 // pred_region
          _
        $region24: #{ffn_pallas.1} parent=11 // pred_fallthru
          _
        // Predicated region
        $region25: #{ffn_pallas.1} parent=11 // pred_check
          %p174 = pneg %p124
        $region26: #{ffn_pallas.1} parent=11 // pred_check_branch
          %176 = sbr.rel (%p174) target = $region28
        $region27: #{ffn_pallas.1} parent=11 // pred_region
          _
        $region28: #{ffn_pallas.1} parent=11 // pred_fallthru
          _
      $region12: #{ffn_pallas.1} parent=5 // pred_fallthru
        _
      %p177 = scmp.lt.s32.totalorder %s14, 2
      // Predicated region
      $region29: #{ffn_pallas.1} parent=5 // pred_check
        %p178 = pneg %p177
      $region30: #{ffn_pallas.1} parent=5 // pred_check_branch
        %180 = sbr.rel (%p178) target = $region32
      $region31: #{ffn_pallas.1} parent=5 // pred_region
        // Predicated region
        $region33: #{ffn_pallas.1} parent=31 // pred_check
          %p181 = pneg %p34
        $region34: #{ffn_pallas.1} parent=31 // pred_check_branch
          %183 = sbr.rel (%p181) target = $region36
        $region35: #{ffn_pallas.1} parent=31 // pred_region
          %p184 = scmp.lt.s32.totalorder %s14, 1
          %s185 = scalar_select %p184, %s14, 1
          %s186 = smul.addr %s185, 8
          %s187 = scalar_lea.vmem %s0, %s186
        $region36: #{ffn_pallas.1} parent=31 // pred_fallthru
          _
      $region32: #{ffn_pallas.1} parent=5 // pred_fallthru
        _
      %p188 = scmp.le.s32.totalorder 1, %s14
      %p189 = scmp.lt.s32.totalorder %s14, 3
      %p190 = pnand %p188, %p189
      %p191 = pneg %p190
      // Predicated region
      $region37: #{ffn_pallas.1} parent=5 // pred_check
        _
      $region38: #{ffn_pallas.1} parent=5 // pred_check_branch
        %193 = sbr.rel (%p190) target = $region40
      $region39: #{ffn_pallas.1} parent=5 // pred_region
        %s194 = ssub.s32 %s14, 1
        %p195 = scmp.lt.s32.totalorder %s19, 1
        %s196 = scalar_select %p195, %s19, 1
        %s197 = smul.addr %s196, 8
        %s198 = scalar_lea.vmem %s0, %s197
        %p199 = pneg %p40
        %p200 = pneg %p37
        %p201 = pneg %p61
        %p202 = pneg %p58
        %p203 = pneg %p82
        %p204 = pneg %p79
        %p205 = pneg %p103
        %p206 = pneg %p100
        %p207 = pneg %p124
        %p208 = pneg %p121
        %p209 = pneg %p150
        %p210 = pneg %p147
        %s211 = sand.u32 %s137, 1
        %s212 = scalar_lea.sflag [#allocation3], %s211
        %s213 = sand.u32 %s137, 1
        %s214 = smul.addr %s213, 8
        %s215 = scalar_lea.vmem [#allocation2], %s214
        %p216 = scmp.lt.s32.totalorder %s19, 1
        %s217 = scalar_select %p216, %s19, 1
        %s218 = smul.addr %s217, 8
        %s219 = scalar_lea.vmem %s0, %s218
        %v221 = vld [vmem:[%s219] sm:$0xff]
        %v222 = vpack.c.bf16 %v221, %v221
        %v223 = vld [vmem:[%s1] sm:$0xf]
        %v224 = vld [vmem:[%s1 + $0x4] sm:$0xf]
        %v225 = vld [vmem:[%s1 + $0x8] sm:$0xf]
        %v226 = vld [vmem:[%s1 + $0xc] sm:$0xf]
        %v227 = vld [vmem:[%s2] sm:$0x1]
        %v229 = vperm.slane %v227, 0
        %v235 = vunpack.c.l.b16 %v223
        %v236 = vunpack.c.l.b16 %v224
        %v237 = vunpack.c.l.b16 %v225
        %v238 = vunpack.c.l.b16 %v226
        %v239 = vpack.c.b16 %v236, %v235
        %v240 = vpack.c.b16 %v238, %v237
        %vm243 = vcmask 261120
        %v245 = vsel %vm243, %v222, 0
        %247 = vmatpush.bf16.msra.mxu0 0
        %248 = vmatpush.bf16.msra.mxu0 0
        %249 = vmatpush.bf16.msra.mxu0 0
        %250 = vmatpush.bf16.msra.mxu0 0
        %251 = vmatpush.bf16.msra.mxu0 0
        %252 = vmatpush.bf16.msra.mxu0 0
        %253 = vmatpush.bf16.msra.mxu0 %v240
        %254 = vmatpush.bf16.msra.mxu0 %v239
        %255 = vmatmul.bf16.gmra.mxu0 %v245
        %v256 = vpop.f32.mrf.mxu0
        %v257 = vadd.f32 %v229, %v256
        %v258 = vpop.f32.mrf.mxu0
        %259 = vdwg.mxu0
        %v260 = vmax.f32 %v257, 0.0
        %v261 = vpack.c.bf16 %v260, %v260
        %v262 = vld [vmem:[%s3] sm:$0xf]
        %v263 = vld [vmem:[%s3 + $0x4] sm:$0xf]
        %v264 = vld [vmem:[%s3 + $0x8] sm:$0xf]
        %v265 = vld [vmem:[%s3 + $0xc] sm:$0xf]
        %v266 = vld [vmem:[%s3 + $0x10] sm:$0xf]
        %v267 = vld [vmem:[%s3 + $0x14] sm:$0xf]
        %v268 = vld [vmem:[%s3 + $0x18] sm:$0xf]
        %v269 = vld [vmem:[%s3 + $0x1c] sm:$0xf]
        %v270 = vld [vmem:[%s4] sm:$0x1]
        %v272 = vperm.slane %v270, 0
        %v282 = vunpack.c.l.b16 %v262
        %v283 = vunpack.c.l.b16 %v263
        %v284 = vunpack.c.l.b16 %v264
        %v285 = vunpack.c.l.b16 %v265
        %v286 = vunpack.c.l.b16 %v266
        %v287 = vunpack.c.l.b16 %v267
        %v288 = vunpack.c.l.b16 %v268
        %v289 = vunpack.c.l.b16 %v269
        %v290 = vpack.c.b16 %v283, %v282
        %v291 = vpack.c.b16 %v285, %v284
        %v292 = vpack.c.b16 %v287, %v286
        %v293 = vpack.c.b16 %v289, %v288
        %vm298 = vcmask 523264
        %v300 = vsel %vm298, %v261, 0
        %302 = vmatpush.bf16.msra.mxu0 0
        %303 = vmatpush.bf16.msra.mxu0 0
        %304 = vmatpush.bf16.msra.mxu0 0
        %305 = vmatpush.bf16.msra.mxu0 0
        %306 = vmatpush.bf16.msra.mxu0 %v293
        %307 = vmatpush.bf16.msra.mxu0 %v292
        %308 = vmatpush.bf16.msra.mxu0 %v291
        %309 = vmatpush.bf16.msra.mxu0 %v290
        %310 = vmatmul.bf16.gmra.mxu0 %v300
        %v311 = vpop.f32.mrf.mxu0
        %v312 = vadd.f32 %v272, %v311
        %v313 = vpop.f32.mrf.mxu0
        %314 = vdwg.mxu0
        %315 = vst.msk [vmem:[%s215] sm:$0xff] %vm243, %v312
        %s316 = sand.u32 %s137, 1
        %s317 = scalar_lea.sflag [#allocation3], %s316
        %s318 = sand.u32 %s137, 1
        %s319 = smul.addr %s318, 8
        %s320 = scalar_lea.vmem [#allocation2], %s319
        // Predicated region
        $region41: #{ffn_pallas.1} parent=39 // pred_check
          %p321 = pneg %p147
        $region42: #{ffn_pallas.1} parent=39 // pred_check_branch
          %323 = sbr.rel (%p321) target = $region44
        $region43: #{ffn_pallas.1} parent=39 // pred_region
          %325 = vsyncadd %s317, 0
          %s326 = smul.addr %s19, 8
          %s327 = scalar_lea.hbm %s5, %s326
          %s329 = sshll.u32 %s320, 4
          %s330 = int_to_ptr.vmem [resolvable:$true] %s329
          %s331 = sshll.u32 %s327, 4
          %s332 = int_to_ptr.hbm [resolvable:$true] %s331
          %334 = dma.vmem_to_hbm [thread:$0]  %s330, 128, %s332, %s317
        $region44: #{ffn_pallas.1} parent=39 // pred_fallthru
          _
      $region40: #{ffn_pallas.1} parent=5 // pred_fallthru
        _
      %p335 = scmp.le.s32.totalorder 2, %s14
      // Predicated region
      $region45: #{ffn_pallas.1} parent=5 // pred_check
        %p336 = pneg %p335
      $region46: #{ffn_pallas.1} parent=5 // pred_check_branch
        %338 = sbr.rel (%p336) target = $region48
      $region47: #{ffn_pallas.1} parent=5 // pred_region
        %s339 = ssub.s32 %s14, 2
        // Predicated region
        $region49: #{ffn_pallas.1} parent=47 // pred_check
          %p340 = pneg %p153
        $region50: #{ffn_pallas.1} parent=47 // pred_check_branch
          %342 = sbr.rel (%p340) target = $region52
        $region51: #{ffn_pallas.1} parent=47 // pred_region
          %s343 = sand.u32 %s138, 1
          %s344 = scalar_lea.sflag [#allocation3], %s343
          %s345 = sand.u32 %s138, 1
          %s346 = smul.addr %s345, 8
          %s347 = scalar_lea.vmem [#allocation2], %s346
          %349 = dma.done %s344, 128
        $region52: #{ffn_pallas.1} parent=47 // pred_fallthru
          _
      $region48: #{ffn_pallas.1} parent=5 // pred_fallthru
        _
    $region6: #{ffn_pallas.1} parent=1 // loop_footer
      %s18 = sadd.s32 1, %s14
    $region7: #{ffn_pallas.1} parent=1 // loop_footer_branch
      %13 = sbr.rel target = $region3
    $region8: #{ffn_pallas.1} parent=1 // loop_exit
      _
    %350 = vsyncpa [#allocation3], 1
    %s351 = scalar_lea.sflag [#allocation3], 1
    %352 = vsyncpa %s351, 1

</llo_original>
